<compile_context>
chip_gen: v7x
topology: tpu7x:2x2x1
jax: 0.10.0
libtpu: 0.0.40
codegen_flags: <defaults>
</compile_context>

<pallas_src>
import jax
import jax.numpy as jnp
from jax.experimental import pallas as pl
from jax.experimental.pallas import tpu as pltpu


# ---------------------------------------------------------------------------
# Fused Pallas kernel: embedding gather + L stacked LSTM cells (one step) + projection
# ---------------------------------------------------------------------------
def _make_fused_decoder_kernel(num_layers, hidden_size, batch_pad):
    L, H, Bp = num_layers, hidden_size, batch_pad

    def kernel(*refs):
        # inputs
        tok_ref, emb_ref, h_ref, c_ref = refs[:4]      # SMEM ids, (V,1,E), (L,Bp,H), (L,Bp,H)
        layer_refs = refs[4:4 + 3 * L]                 # (w_x, w_h, b) per layer
        fcw_ref = refs[4 + 3 * L]                      # (H, O_pad) bf16
        fcb_ref = refs[5 + 3 * L]                      # (1, O_pad) f32
        # outputs
        pred_ref = refs[6 + 3 * L]                     # (Bp, O_pad) f32
        h_out_ref = refs[7 + 3 * L]                    # (L, Bp, H) f32
        c_out_ref = refs[8 + 3 * L]                    # (L, Bp, H) f32
        # scratch
        x_scr = refs[9 + 3 * L]                        # (Bp, E) f32 VMEM

        # In-kernel embedding row gather (dropout == identity in eval mode).
        for b in range(Bp):                            # Bp is small & static -> unrolled
            x_scr[pl.ds(b, 1), :] = emb_ref[tok_ref[b]]
        x = x_scr[...]                                 # (Bp, E) f32

        for l in range(L):                             # unrolled layer loop
            w_x_ref = layer_refs[3 * l]                # (in_dim, 4H) bf16
            w_h_ref = layer_refs[3 * l + 1]            # (H, 4H)     bf16
            b_ref = layer_refs[3 * l + 2]              # (1, 4H)     f32
            h_prev = h_ref[l]                          # (Bp, H) f32
            c_prev = c_ref[l]                          # (Bp, H) f32

            # Two MXU pushes into one f32 accumulator (no lane concat).
            gates = (jnp.dot(x.astype(jnp.bfloat16), w_x_ref[...],
                             preferred_element_type=jnp.float32)
                     + jnp.dot(h_prev.astype(jnp.bfloat16), w_h_ref[...],
                               preferred_element_type=jnp.float32)
                     + b_ref[...])                     # (Bp, 4H) f32

            # gate layout (reordered at init): [i, f, o, g]
            sig = jax.nn.sigmoid(gates[:, :3 * H])     # one contiguous EUP region
            i_g = sig[:, 0 * H:1 * H]
            f_g = sig[:, 1 * H:2 * H]
            o_g = sig[:, 2 * H:3 * H]
            g_g = jnp.tanh(gates[:, 3 * H:4 * H])

            c_new = f_g * c_prev + i_g * g_g
            h_new = o_g * jnp.tanh(c_new)

            h_out_ref[l] = h_new
            c_out_ref[l] = c_new
            x = h_new                                  # inter-layer dropout = identity (eval)

        pred_ref[...] = (jnp.dot(x.astype(jnp.bfloat16), fcw_ref[...],
                                 preferred_element_type=jnp.float32)
                         + fcb_ref[...]).astype(pred_ref.dtype)

    return kernel


# ---------------------------------------------------------------------------
# Parameter construction (PyTorch-shaped f32 draws -> kernel params + reference params)
# ---------------------------------------------------------------------------
def init_decoder_params(key, input_size, embedding_size, hidden_size,
                        output_size, num_layers):
    H = hidden_size
    O_pad = max(128, -(-output_size // 128) * 128)     # lane-dense prediction slab
    scale = 1.0 / (hidden_size ** 0.5)
    keys = jax.random.split(key, 3 + 4 * num_layers)
    it = iter(keys)

    def u(k, shape):
        return jax.random.uniform(k, shape, jnp.float32, -scale, scale)

    def reorder_gates(m):
        # PyTorch last-axis gate order [i, f, g, o] -> kernel order [i, f, o, g]
        return jnp.concatenate([m[..., 0 * H:1 * H], m[..., 1 * H:2 * H],
                                m[..., 3 * H:4 * H], m[..., 2 * H:3 * H]], axis=-1)

    embedding = jax.random.normal(next(it), (input_size, embedding_size), jnp.float32)

    ref_params = {"embedding": embedding, "layers": []}
    params = {
        # (V, 1, E): dynamic token index lands on the untiled leading dim in-kernel
        "embedding": embedding.reshape(input_size, 1, embedding_size),
        "layers": [],
    }

    for layer in range(num_layers):
        in_dim = embedding_size if layer == 0 else hidden_size
        w_ih = u(next(it), (4 * H, in_dim))
        w_hh = u(next(it), (4 * H, hidden_size))
        b_ih = u(next(it), (4 * H,))
        b_hh = u(next(it), (4 * H,))
        ref_params["layers"].append(
            {"w_ih": w_ih, "w_hh": w_hh, "b_ih": b_ih, "b_hh": b_hh})
        params["layers"].append({
            "w_x": reorder_gates(jnp.transpose(w_ih)).astype(jnp.bfloat16),   # (in_dim, 4H)
            "w_h": reorder_gates(jnp.transpose(w_hh)).astype(jnp.bfloat16),   # (H, 4H)
            "b": reorder_gates((b_ih + b_hh)[None, :]),                       # (1, 4H) f32
        })

    fc_w = u(next(it), (output_size, hidden_size))
    fc_b = u(next(it), (output_size,))
    ref_params["fc_w"] = fc_w
    ref_params["fc_b"] = fc_b

    fc_w_t = jnp.zeros((hidden_size, O_pad), jnp.float32)
    fc_w_t = fc_w_t.at[:, :output_size].set(jnp.transpose(fc_w))
    fc_b_p = jnp.zeros((1, O_pad), jnp.float32).at[:, :output_size].set(fc_b[None, :])
    params["fc_w_t"] = fc_w_t.astype(jnp.bfloat16)     # (H, O_pad) bf16
    params["fc_b"] = fc_b_p                            # (1, O_pad) f32
    return params, ref_params


# ---------------------------------------------------------------------------
# One decode step on persistently padded state (matches Decoder.forward, eval mode)
# ---------------------------------------------------------------------------
@jax.jit
def decoder_step(tokens_pad, hidden_pad, cell_pad, params):
    """
    tokens_pad : (B_pad,)        int32 token ids (padded rows may be anything valid, e.g. 0)
    hidden_pad : (L, B_pad, H)   float32
    cell_pad   : (L, B_pad, H)   float32
    returns    : preds_pad (B_pad, O_pad) f32, new hidden_pad, new cell_pad
    """
    L, Bp, H = hidden_pad.shape
    E = params["embedding"].shape[-1]
    O_pad = params["fc_w_t"].shape[-1]

    flat_layer_args = []
    for lp in params["layers"]:
        flat_layer_args += [lp["w_x"], lp["w_h"], lp["b"]]
    n_inputs = 4 + len(flat_layer_args) + 2

    kernel = _make_fused_decoder_kernel(L, H, Bp)
    return pl.pallas_call(
        kernel,
        out_shape=(jax.ShapeDtypeStruct((Bp, O_pad), jnp.float32),
                   jax.ShapeDtypeStruct((L, Bp, H), jnp.float32),
                   jax.ShapeDtypeStruct((L, Bp, H), jnp.float32)),
        in_specs=[pl.BlockSpec(memory_space=pltpu.MemorySpace.SMEM)]           # token ids
                + [pl.BlockSpec(memory_space=pltpu.MemorySpace.VMEM)] * (n_inputs - 1),
        out_specs=(pl.BlockSpec(memory_space=pltpu.MemorySpace.VMEM),
                   pl.BlockSpec(memory_space=pltpu.MemorySpace.VMEM),
                   pl.BlockSpec(memory_space=pltpu.MemorySpace.VMEM)),
        scratch_shapes=[pltpu.VMEM((Bp, E), jnp.float32)],
        # hidden/cell state buffers updated in place (inputs 2,3 -> outputs 1,2)
        input_output_aliases={2: 1, 3: 2},
    )(tokens_pad, params["embedding"], hidden_pad, cell_pad,
      *flat_layer_args, params["fc_w_t"], params["fc_b"])


# ---------------------------------------------------------------------------
# Pure-JAX reference: f32, UN-merged weights, PyTorch gate order [i, f, g, o]
# ---------------------------------------------------------------------------
def _decoder_forward_ref(x_tokens, hidden, cell, ref_params):
    H = hidden.shape[-1]
    x = ref_params["embedding"][x_tokens]
    new_h, new_c = [], []
    for l in range(hidden.shape[0]):
        lp = ref_params["layers"][l]
        gates = (x @ lp["w_ih"].T + hidden[l] @ lp["w_hh"].T
                 + lp["b_ih"] + lp["b_hh"])
        i_g = jax.nn.sigmoid(gates[:, 0 * H:1 * H])
        f_g = jax.nn.sigmoid(gates[:, 1 * H:2 * H])
        g_g = jnp.tanh(gates[:, 2 * H:3 * H])
        o_g = jax.nn.sigmoid(gates[:, 3 * H:4 * H])
        c_new = f_g * cell[l] + i_g * g_g
        h_new = o_g * jnp.tanh(c_new)
        new_h.append(h_new)
        new_c.append(c_new)
        x = h_new
    preds = x @ ref_params["fc_w"].T + ref_params["fc_b"]
    return preds, jnp.stack(new_h), jnp.stack(new_c)


# ---------------------------------------------------------------------------
if __name__ == "__main__":
    INPUT_SIZE = 64      # vocab
    EMBEDDING_SIZE = 32
    HIDDEN_SIZE = 32
    OUTPUT_SIZE = 64
    NUM_LAYERS = 2
    BATCH = 2
    B_PAD = max(8, -(-BATCH // 8) * 8)                  # sublane-align the batch once

    key = jax.random.PRNGKey(0)
    k_params, k_tok1, k_tok2, k_h, k_c = jax.random.split(key, 5)

    params, ref_params = init_decoder_params(
        k_params, INPUT_SIZE, EMBEDDING_SIZE, HIDDEN_SIZE, OUTPUT_SIZE, NUM_LAYERS)

    tok1 = jax.random.randint(k_tok1, (BATCH,), 0, INPUT_SIZE, jnp.int32)
    tok2 = jax.random.randint(k_tok2, (BATCH,), 0, INPUT_SIZE, jnp.int32)
    hidden = jax.random.normal(k_h, (NUM_LAYERS, BATCH, HIDDEN_SIZE), jnp.float32)
    cell = jax.random.normal(k_c, (NUM_LAYERS, BATCH, HIDDEN_SIZE), jnp.float32)

    # Pad once; state stays padded across decode steps (no per-step pad/slice).
    tok1_p = jnp.pad(tok1, (0, B_PAD - BATCH))
    tok2_p = jnp.pad(tok2, (0, B_PAD - BATCH))
    h_p = jnp.pad(hidden, ((0, 0), (0, B_PAD - BATCH), (0, 0)))
    c_p = jnp.pad(cell, ((0, 0), (0, B_PAD - BATCH), (0, 0)))

    # Two chained decode steps (state buffers reused / aliased in place).
    preds1_p, h_p, c_p = decoder_step(tok1_p, h_p, c_p, params)
    preds2_p, h_p, c_p = decoder_step(tok2_p, h_p, c_p, params)
    jax.block_until_ready((preds1_p, preds2_p, h_p, c_p))

    preds1 = preds1_p[:BATCH, :OUTPUT_SIZE]
    preds2 = preds2_p[:BATCH, :OUTPUT_SIZE]
    new_hidden = h_p[:, :BATCH]
    new_cell = c_p[:, :BATCH]

    assert preds1.shape == (BATCH, OUTPUT_SIZE)
    assert preds2.shape == (BATCH, OUTPUT_SIZE)
    assert new_hidden.shape == (NUM_LAYERS, BATCH, HIDDEN_SIZE)
    assert new_cell.shape == (NUM_LAYERS, BATCH, HIDDEN_SIZE)

    # Correctness vs. f32, un-merged, PyTorch-gate-order reference (covers the
    # reorder / bias-merge / bf16 weight transformation too).
    p1_r, h_r, c_r = _decoder_forward_ref(tok1, hidden, cell, ref_params)
    p2_r, h_r, c_r = _decoder_forward_ref(tok2, h_r, c_r, ref_params)
    tol = dict(rtol=5e-2, atol=5e-2)
    assert jnp.allclose(preds1, p1_r, **tol)
    assert jnp.allclose(preds2, p2_r, **tol)
    assert jnp.allclose(new_hidden, h_r, **tol)
    assert jnp.allclose(new_cell, c_r, **tol)

    print("KERNEL_OK")
</pallas_src>

<mosaic_0001>
module attributes {stable_mosaic.version = 11 : i64} {
  func.func @kernel(%arg0: memref<8xi32, #tpu.memory_space<smem>>, %arg1: memref<64x1x32xf32, #tpu.memory_space<vmem>>, %arg2: memref<2x8x32xf32, #tpu.memory_space<vmem>>, %arg3: memref<2x8x32xf32, #tpu.memory_space<vmem>>, %arg4: memref<32x128xbf16, #tpu.memory_space<vmem>>, %arg5: memref<32x128xbf16, #tpu.memory_space<vmem>>, %arg6: memref<1x128xf32, #tpu.memory_space<vmem>>, %arg7: memref<32x128xbf16, #tpu.memory_space<vmem>>, %arg8: memref<32x128xbf16, #tpu.memory_space<vmem>>, %arg9: memref<1x128xf32, #tpu.memory_space<vmem>>, %arg10: memref<32x128xbf16, #tpu.memory_space<vmem>>, %arg11: memref<1x128xf32, #tpu.memory_space<vmem>>, %arg12: memref<8x128xf32, #tpu.memory_space<vmem>>, %arg13: memref<2x8x32xf32, #tpu.memory_space<vmem>>, %arg14: memref<2x8x32xf32, #tpu.memory_space<vmem>>, %arg15: memref<8x32xf32, #tpu.memory_space<vmem>>) attributes {dimension_semantics = [], scalar_prefetch = 0 : i64, scratch_operands = 1 : i64, tpu.core_type = #tpu.core_type<tc>} {
    %c0 = arith.constant 0 : index
    %0 = memref.load %arg0[%c0] : memref<8xi32, #tpu.memory_space<smem>>
    %1 = arith.index_cast %0 : i32 to index
    %c0_0 = arith.constant 0 : index
    %c0_1 = arith.constant 0 : index
    %2 = vector.load %arg1[%1, %c0_0, %c0_1] : memref<64x1x32xf32, #tpu.memory_space<vmem>>, vector<1x1x32xf32>
    %3 = vector.shape_cast %2 : vector<1x1x32xf32> to vector<1x32xf32>
    %c0_2 = arith.constant 0 : index
    %c0_3 = arith.constant 0 : index
    %4 = vector.load %arg15[%c0_2, %c0_3] : memref<8x32xf32, #tpu.memory_space<vmem>>, vector<1x32xf32>
    tpu.vector_store %arg15[%c0_2, %c0_3], %3 {strides = array<i32>} : memref<8x32xf32, #tpu.memory_space<vmem>>, vector<1x32xf32>,
    %c1 = arith.constant 1 : index
    %5 = memref.load %arg0[%c1] : memref<8xi32, #tpu.memory_space<smem>>
    %6 = arith.index_cast %5 : i32 to index
    %c0_4 = arith.constant 0 : index
    %c0_5 = arith.constant 0 : index
    %7 = vector.load %arg1[%6, %c0_4, %c0_5] : memref<64x1x32xf32, #tpu.memory_space<vmem>>, vector<1x1x32xf32>
    %8 = vector.shape_cast %7 : vector<1x1x32xf32> to vector<1x32xf32>
    %c1_6 = arith.constant 1 : index
    %c0_7 = arith.constant 0 : index
    %9 = vector.load %arg15[%c1_6, %c0_7] : memref<8x32xf32, #tpu.memory_space<vmem>>, vector<1x32xf32>
    tpu.vector_store %arg15[%c1_6, %c0_7], %8 {strides = array<i32>} : memref<8x32xf32, #tpu.memory_space<vmem>>, vector<1x32xf32>,
    %c2 = arith.constant 2 : index
    %10 = memref.load %arg0[%c2] : memref<8xi32, #tpu.memory_space<smem>>
    %11 = arith.index_cast %10 : i32 to index
    %c0_8 = arith.constant 0 : index
    %c0_9 = arith.constant 0 : index
    %12 = vector.load %arg1[%11, %c0_8, %c0_9] : memref<64x1x32xf32, #tpu.memory_space<vmem>>, vector<1x1x32xf32>
    %13 = vector.shape_cast %12 : vector<1x1x32xf32> to vector<1x32xf32>
    %c2_10 = arith.constant 2 : index
    %c0_11 = arith.constant 0 : index
    %14 = vector.load %arg15[%c2_10, %c0_11] : memref<8x32xf32, #tpu.memory_space<vmem>>, vector<1x32xf32>
    tpu.vector_store %arg15[%c2_10, %c0_11], %13 {strides = array<i32>} : memref<8x32xf32, #tpu.memory_space<vmem>>, vector<1x32xf32>,
    %c3 = arith.constant 3 : index
    %15 = memref.load %arg0[%c3] : memref<8xi32, #tpu.memory_space<smem>>
    %16 = arith.index_cast %15 : i32 to index
    %c0_12 = arith.constant 0 : index
    %c0_13 = arith.constant 0 : index
    %17 = vector.load %arg1[%16, %c0_12, %c0_13] : memref<64x1x32xf32, #tpu.memory_space<vmem>>, vector<1x1x32xf32>
    %18 = vector.shape_cast %17 : vector<1x1x32xf32> to vector<1x32xf32>
    %c3_14 = arith.constant 3 : index
    %c0_15 = arith.constant 0 : index
    %19 = vector.load %arg15[%c3_14, %c0_15] : memref<8x32xf32, #tpu.memory_space<vmem>>, vector<1x32xf32>
    tpu.vector_store %arg15[%c3_14, %c0_15], %18 {strides = array<i32>} : memref<8x32xf32, #tpu.memory_space<vmem>>, vector<1x32xf32>,
    %c4 = arith.constant 4 : index
    %20 = memref.load %arg0[%c4] : memref<8xi32, #tpu.memory_space<smem>>
    %21 = arith.index_cast %20 : i32 to index
    %c0_16 = arith.constant 0 : index
    %c0_17 = arith.constant 0 : index
    %22 = vector.load %arg1[%21, %c0_16, %c0_17] : memref<64x1x32xf32, #tpu.memory_space<vmem>>, vector<1x1x32xf32>
    %23 = vector.shape_cast %22 : vector<1x1x32xf32> to vector<1x32xf32>
    %c4_18 = arith.constant 4 : index
    %c0_19 = arith.constant 0 : index
    %24 = vector.load %arg15[%c4_18, %c0_19] : memref<8x32xf32, #tpu.memory_space<vmem>>, vector<1x32xf32>
    tpu.vector_store %arg15[%c4_18, %c0_19], %23 {strides = array<i32>} : memref<8x32xf32, #tpu.memory_space<vmem>>, vector<1x32xf32>,
    %c5 = arith.constant 5 : index
    %25 = memref.load %arg0[%c5] : memref<8xi32, #tpu.memory_space<smem>>
    %26 = arith.index_cast %25 : i32 to index
    %c0_20 = arith.constant 0 : index
    %c0_21 = arith.constant 0 : index
    %27 = vector.load %arg1[%26, %c0_20, %c0_21] : memref<64x1x32xf32, #tpu.memory_space<vmem>>, vector<1x1x32xf32>
    %28 = vector.shape_cast %27 : vector<1x1x32xf32> to vector<1x32xf32>
    %c5_22 = arith.constant 5 : index
    %c0_23 = arith.constant 0 : index
    %29 = vector.load %arg15[%c5_22, %c0_23] : memref<8x32xf32, #tpu.memory_space<vmem>>, vector<1x32xf32>
    tpu.vector_store %arg15[%c5_22, %c0_23], %28 {strides = array<i32>} : memref<8x32xf32, #tpu.memory_space<vmem>>, vector<1x32xf32>,
    %c6 = arith.constant 6 : index
    %30 = memref.load %arg0[%c6] : memref<8xi32, #tpu.memory_space<smem>>
    %31 = arith.index_cast %30 : i32 to index
    %c0_24 = arith.constant 0 : index
    %c0_25 = arith.constant 0 : index
    %32 = vector.load %arg1[%31, %c0_24, %c0_25] : memref<64x1x32xf32, #tpu.memory_space<vmem>>, vector<1x1x32xf32>
    %33 = vector.shape_cast %32 : vector<1x1x32xf32> to vector<1x32xf32>
    %c6_26 = arith.constant 6 : index
    %c0_27 = arith.constant 0 : index
    %34 = vector.load %arg15[%c6_26, %c0_27] : memref<8x32xf32, #tpu.memory_space<vmem>>, vector<1x32xf32>
    tpu.vector_store %arg15[%c6_26, %c0_27], %33 {strides = array<i32>} : memref<8x32xf32, #tpu.memory_space<vmem>>, vector<1x32xf32>,
    %c7 = arith.constant 7 : index
    %35 = memref.load %arg0[%c7] : memref<8xi32, #tpu.memory_space<smem>>
    %36 = arith.index_cast %35 : i32 to index
    %c0_28 = arith.constant 0 : index
    %c0_29 = arith.constant 0 : index
    %37 = vector.load %arg1[%36, %c0_28, %c0_29] : memref<64x1x32xf32, #tpu.memory_space<vmem>>, vector<1x1x32xf32>
    %38 = vector.shape_cast %37 : vector<1x1x32xf32> to vector<1x32xf32>
    %c7_30 = arith.constant 7 : index
    %c0_31 = arith.constant 0 : index
    %39 = vector.load %arg15[%c7_30, %c0_31] : memref<8x32xf32, #tpu.memory_space<vmem>>, vector<1x32xf32>
    tpu.vector_store %arg15[%c7_30, %c0_31], %38 {strides = array<i32>} : memref<8x32xf32, #tpu.memory_space<vmem>>, vector<1x32xf32>,
    %c0_32 = arith.constant 0 : index
    %c0_33 = arith.constant 0 : index
    %40 = vector.load %arg15[%c0_32, %c0_33] : memref<8x32xf32, #tpu.memory_space<vmem>>, vector<8x32xf32>
    %c0_34 = arith.constant 0 : index
    %c0_35 = arith.constant 0 : index
    %c0_36 = arith.constant 0 : index
    %41 = vector.load %arg2[%c0_34, %c0_35, %c0_36] : memref<2x8x32xf32, #tpu.memory_space<vmem>>, vector<1x8x32xf32>
    %42 = vector.shape_cast %41 : vector<1x8x32xf32> to vector<8x32xf32>
    %c0_37 = arith.constant 0 : index
    %c0_38 = arith.constant 0 : index
    %c0_39 = arith.constant 0 : index
    %43 = vector.load %arg3[%c0_37, %c0_38, %c0_39] : memref<2x8x32xf32, #tpu.memory_space<vmem>>, vector<1x8x32xf32>
    %44 = vector.shape_cast %43 : vector<1x8x32xf32> to vector<8x32xf32>
    %45 = arith.truncf %40 : vector<8x32xf32> to vector<8x32xbf16>
    %c0_40 = arith.constant 0 : index
    %c0_41 = arith.constant 0 : index
    %46 = vector.load %arg4[%c0_40, %c0_41] : memref<32x128xbf16, #tpu.memory_space<vmem>>, vector<32x128xbf16>
    %cst = arith.constant dense<0.000000e+00> : vector<8x128xf32>
    %47 = tpu.matmul %45, %46, %cst {dimension_numbers = #tpu.dot_dimension_numbers<[1], [0], [0], [1], [0, 0, 1, 1], [], []>} : vector<8x32xbf16>, vector<32x128xbf16>, vector<8x128xf32> -> vector<8x128xf32>
    %48 = arith.truncf %42 : vector<8x32xf32> to vector<8x32xbf16>
    %c0_42 = arith.constant 0 : index
    %c0_43 = arith.constant 0 : index
    %49 = vector.load %arg5[%c0_42, %c0_43] : memref<32x128xbf16, #tpu.memory_space<vmem>>, vector<32x128xbf16>
    %cst_44 = arith.constant dense<0.000000e+00> : vector<8x128xf32>
    %50 = tpu.matmul %48, %49, %cst_44 {dimension_numbers = #tpu.dot_dimension_numbers<[1], [0], [0], [1], [0, 0, 1, 1], [], []>} : vector<8x32xbf16>, vector<32x128xbf16>, vector<8x128xf32> -> vector<8x128xf32>
    %51 = arith.addf %47, %50 : vector<8x128xf32>
    %c0_45 = arith.constant 0 : index
    %c0_46 = arith.constant 0 : index
    %52 = vector.load %arg6[%c0_45, %c0_46] : memref<1x128xf32, #tpu.memory_space<vmem>>, vector<1x128xf32>
    %53 = vector.broadcast %52 : vector<1x128xf32> to vector<8x128xf32>
    %54 = arith.addf %51, %53 : vector<8x128xf32>
    %55 = vector.extract_strided_slice %54 {offsets = [0, 0], sizes = [8, 96], strides = [1, 1]} : vector<8x128xf32> to vector<8x96xf32>
    %56 = arith.negf %55 : vector<8x96xf32>
    %57 = math.exp %56 : vector<8x96xf32>
    %cst_47 = arith.constant 1.000000e+00 : f32
    %58 = vector.broadcast %cst_47 : f32 to vector<8x96xf32>
    %59 = arith.addf %58, %57 : vector<8x96xf32>
    %60 = arith.divf %58, %59 : vector<8x96xf32>
    %61 = vector.extract_strided_slice %60 {offsets = [0, 0], sizes = [8, 32], strides = [1, 1]} : vector<8x96xf32> to vector<8x32xf32>
    %62 = vector.extract_strided_slice %60 {offsets = [0, 32], sizes = [8, 32], strides = [1, 1]} : vector<8x96xf32> to vector<8x32xf32>
    %63 = vector.extract_strided_slice %60 {offsets = [0, 64], sizes = [8, 32], strides = [1, 1]} : vector<8x96xf32> to vector<8x32xf32>
    %64 = vector.extract_strided_slice %54 {offsets = [0, 96], sizes = [8, 32], strides = [1, 1]} : vector<8x128xf32> to vector<8x32xf32>
    %65 = math.tanh %64 : vector<8x32xf32>
    %66 = arith.mulf %62, %44 : vector<8x32xf32>
    %67 = arith.mulf %61, %65 : vector<8x32xf32>
    %68 = arith.addf %66, %67 : vector<8x32xf32>
    %69 = math.tanh %68 : vector<8x32xf32>
    %70 = arith.mulf %63, %69 : vector<8x32xf32>
    %c0_48 = arith.constant 0 : index
    %c0_49 = arith.constant 0 : index
    %c0_50 = arith.constant 0 : index
    %71 = vector.load %arg13[%c0_48, %c0_49, %c0_50] : memref<2x8x32xf32, #tpu.memory_space<vmem>>, vector<1x8x32xf32>
    %72 = vector.shape_cast %71 : vector<1x8x32xf32> to vector<8x32xf32>
    %73 = vector.shape_cast %70 : vector<8x32xf32> to vector<1x8x32xf32>
    tpu.vector_store %arg13[%c0_48, %c0_49, %c0_50], %73 {strides = array<i32>} : memref<2x8x32xf32, #tpu.memory_space<vmem>>, vector<1x8x32xf32>,
    %c0_51 = arith.constant 0 : index
    %c0_52 = arith.constant 0 : index
    %c0_53 = arith.constant 0 : index
    %74 = vector.load %arg14[%c0_51, %c0_52, %c0_53] : memref<2x8x32xf32, #tpu.memory_space<vmem>>, vector<1x8x32xf32>
    %75 = vector.shape_cast %74 : vector<1x8x32xf32> to vector<8x32xf32>
    %76 = vector.shape_cast %68 : vector<8x32xf32> to vector<1x8x32xf32>
    tpu.vector_store %arg14[%c0_51, %c0_52, %c0_53], %76 {strides = array<i32>} : memref<2x8x32xf32, #tpu.memory_space<vmem>>, vector<1x8x32xf32>,
    %c1_54 = arith.constant 1 : index
    %c0_55 = arith.constant 0 : index
    %c0_56 = arith.constant 0 : index
    %77 = vector.load %arg2[%c1_54, %c0_55, %c0_56] : memref<2x8x32xf32, #tpu.memory_space<vmem>>, vector<1x8x32xf32>
    %78 = vector.shape_cast %77 : vector<1x8x32xf32> to vector<8x32xf32>
    %c1_57 = arith.constant 1 : index
    %c0_58 = arith.constant 0 : index
    %c0_59 = arith.constant 0 : index
    %79 = vector.load %arg3[%c1_57, %c0_58, %c0_59] : memref<2x8x32xf32, #tpu.memory_space<vmem>>, vector<1x8x32xf32>
    %80 = vector.shape_cast %79 : vector<1x8x32xf32> to vector<8x32xf32>
    %81 = arith.truncf %70 : vector<8x32xf32> to vector<8x32xbf16>
    %c0_60 = arith.constant 0 : index
    %c0_61 = arith.constant 0 : index
    %82 = vector.load %arg7[%c0_60, %c0_61] : memref<32x128xbf16, #tpu.memory_space<vmem>>, vector<32x128xbf16>
    %cst_62 = arith.constant dense<0.000000e+00> : vector<8x128xf32>
    %83 = tpu.matmul %81, %82, %cst_62 {dimension_numbers = #tpu.dot_dimension_numbers<[1], [0], [0], [1], [0, 0, 1, 1], [], []>} : vector<8x32xbf16>, vector<32x128xbf16>, vector<8x128xf32> -> vector<8x128xf32>
    %84 = arith.truncf %78 : vector<8x32xf32> to vector<8x32xbf16>
    %c0_63 = arith.constant 0 : index
    %c0_64 = arith.constant 0 : index
    %85 = vector.load %arg8[%c0_63, %c0_64] : memref<32x128xbf16, #tpu.memory_space<vmem>>, vector<32x128xbf16>
    %cst_65 = arith.constant dense<0.000000e+00> : vector<8x128xf32>
    %86 = tpu.matmul %84, %85, %cst_65 {dimension_numbers = #tpu.dot_dimension_numbers<[1], [0], [0], [1], [0, 0, 1, 1], [], []>} : vector<8x32xbf16>, vector<32x128xbf16>, vector<8x128xf32> -> vector<8x128xf32>
    %87 = arith.addf %83, %86 : vector<8x128xf32>
    %c0_66 = arith.constant 0 : index
    %c0_67 = arith.constant 0 : index
    %88 = vector.load %arg9[%c0_66, %c0_67] : memref<1x128xf32, #tpu.memory_space<vmem>>, vector<1x128xf32>
    %89 = vector.broadcast %88 : vector<1x128xf32> to vector<8x128xf32>
    %90 = arith.addf %87, %89 : vector<8x128xf32>
    %91 = vector.extract_strided_slice %90 {offsets = [0, 0], sizes = [8, 96], strides = [1, 1]} : vector<8x128xf32> to vector<8x96xf32>
    %92 = arith.negf %91 : vector<8x96xf32>
    %93 = math.exp %92 : vector<8x96xf32>
    %cst_68 = arith.constant 1.000000e+00 : f32
    %94 = vector.broadcast %cst_68 : f32 to vector<8x96xf32>
    %95 = arith.addf %94, %93 : vector<8x96xf32>
    %96 = arith.divf %94, %95 : vector<8x96xf32>
    %97 = vector.extract_strided_slice %96 {offsets = [0, 0], sizes = [8, 32], strides = [1, 1]} : vector<8x96xf32> to vector<8x32xf32>
    %98 = vector.extract_strided_slice %96 {offsets = [0, 32], sizes = [8, 32], strides = [1, 1]} : vector<8x96xf32> to vector<8x32xf32>
    %99 = vector.extract_strided_slice %96 {offsets = [0, 64], sizes = [8, 32], strides = [1, 1]} : vector<8x96xf32> to vector<8x32xf32>
    %100 = vector.extract_strided_slice %90 {offsets = [0, 96], sizes = [8, 32], strides = [1, 1]} : vector<8x128xf32> to vector<8x32xf32>
    %101 = math.tanh %100 : vector<8x32xf32>
    %102 = arith.mulf %98, %80 : vector<8x32xf32>
    %103 = arith.mulf %97, %101 : vector<8x32xf32>
    %104 = arith.addf %102, %103 : vector<8x32xf32>
    %105 = math.tanh %104 : vector<8x32xf32>
    %106 = arith.mulf %99, %105 : vector<8x32xf32>
    %c1_69 = arith.constant 1 : index
    %c0_70 = arith.constant 0 : index
    %c0_71 = arith.constant 0 : index
    %107 = vector.load %arg13[%c1_69, %c0_70, %c0_71] : memref<2x8x32xf32, #tpu.memory_space<vmem>>, vector<1x8x32xf32>
    %108 = vector.shape_cast %107 : vector<1x8x32xf32> to vector<8x32xf32>
    %109 = vector.shape_cast %106 : vector<8x32xf32> to vector<1x8x32xf32>
    tpu.vector_store %arg13[%c1_69, %c0_70, %c0_71], %109 {strides = array<i32>} : memref<2x8x32xf32, #tpu.memory_space<vmem>>, vector<1x8x32xf32>,
    %c1_72 = arith.constant 1 : index
    %c0_73 = arith.constant 0 : index
    %c0_74 = arith.constant 0 : index
    %110 = vector.load %arg14[%c1_72, %c0_73, %c0_74] : memref<2x8x32xf32, #tpu.memory_space<vmem>>, vector<1x8x32xf32>
    %111 = vector.shape_cast %110 : vector<1x8x32xf32> to vector<8x32xf32>
    %112 = vector.shape_cast %104 : vector<8x32xf32> to vector<1x8x32xf32>
    tpu.vector_store %arg14[%c1_72, %c0_73, %c0_74], %112 {strides = array<i32>} : memref<2x8x32xf32, #tpu.memory_space<vmem>>, vector<1x8x32xf32>,
    %113 = arith.truncf %106 : vector<8x32xf32> to vector<8x32xbf16>
    %c0_75 = arith.constant 0 : index
    %c0_76 = arith.constant 0 : index
    %114 = vector.load %arg10[%c0_75, %c0_76] : memref<32x128xbf16, #tpu.memory_space<vmem>>, vector<32x128xbf16>
    %cst_77 = arith.constant dense<0.000000e+00> : vector<8x128xf32>
    %115 = tpu.matmul %113, %114, %cst_77 {dimension_numbers = #tpu.dot_dimension_numbers<[1], [0], [0], [1], [0, 0, 1, 1], [], []>} : vector<8x32xbf16>, vector<32x128xbf16>, vector<8x128xf32> -> vector<8x128xf32>
    %c0_78 = arith.constant 0 : index
    %c0_79 = arith.constant 0 : index
    %116 = vector.load %arg11[%c0_78, %c0_79] : memref<1x128xf32, #tpu.memory_space<vmem>>, vector<1x128xf32>
    %117 = vector.broadcast %116 : vector<1x128xf32> to vector<8x128xf32>
    %118 = arith.addf %115, %117 : vector<8x128xf32>
    %c0_80 = arith.constant 0 : index
    %c0_81 = arith.constant 0 : index
    %119 = vector.load %arg12[%c0_80, %c0_81] : memref<8x128xf32, #tpu.memory_space<vmem>>, vector<8x128xf32>
    tpu.vector_store %arg12[%c0_80, %c0_81], %118 {strides = array<i32>} : memref<8x128xf32, #tpu.memory_space<vmem>>, vector<8x128xf32>,
    return
  }
}

</mosaic_0001>

<llo_original>
// kernel: decoder_step.1
$region0: #{decoder_step.1}
  #allocation0 [shape = 'u32[]', space=smem, size = 0x4, offset = 0x4, fixed_abs, tag = 'smem constant byte address 0x4 - core index']
  #allocation1 [shape = 'u32[144,128]{1,0:T(1,128)}', space=vmem, size = 0x12000, scoped, tag = 'internal scratch']
  #allocation2 [shape = 'f32[8,32]{1,0:T(8,128)}', space=vmem, size = 0x1000, scoped, tag = 'scratch operand']
  %s0 = inlined_call_operand.vmem [shape: s32[8], index: 0, kind: input, shape index: {}]
  %s1 = inlined_call_operand.vmem [shape: f32[64,1,32], index: 1, kind: input, shape index: {}]
  %s2 = inlined_call_operand.hbm [shape: f32[2,8,32], index: 2, kind: input, shape index: {}, may-alias: {2,13}]
  %s3 = inlined_call_operand.hbm [shape: f32[2,8,32], index: 3, kind: input, shape index: {}, may-alias: {3,14}]
  %s4 = inlined_call_operand.vmem [shape: bf16[32,128], index: 4, kind: input, shape index: {}]
  %s5 = inlined_call_operand.vmem [shape: bf16[32,128], index: 5, kind: input, shape index: {}]
  %s6 = inlined_call_operand.vmem [shape: f32[1,128], index: 6, kind: input, shape index: {}]
  %s7 = inlined_call_operand.vmem [shape: bf16[32,128], index: 7, kind: input, shape index: {}]
  %s8 = inlined_call_operand.vmem [shape: bf16[32,128], index: 8, kind: input, shape index: {}]
  %s9 = inlined_call_operand.vmem [shape: f32[1,128], index: 9, kind: input, shape index: {}]
  %s10 = inlined_call_operand.vmem [shape: bf16[32,128], index: 10, kind: input, shape index: {}]
  %s11 = inlined_call_operand.vmem [shape: f32[1,128], index: 11, kind: input, shape index: {}]
  %s12 = inlined_call_operand.hbm [shape: f32[8,128], index: 12, kind: output, shape index: {0}]
  %s13 = inlined_call_operand.hbm [shape: f32[2,8,32], index: 13, kind: output, shape index: {1}, may-alias: {2,13}]
  %s14 = inlined_call_operand.hbm [shape: f32[2,8,32], index: 14, kind: output, shape index: {2}, may-alias: {3,14}]
  %15 = xla_tuple %s12, %s13, %s14
  %s16 = sld [smem:[#allocation0]]
  $region86: #{decoder_step.1} parent=0
    _
  %s18 = ssub.s32 1, %s16
  %s19 = scalar_select 0, %s18, %s16
  $region1: #{decoder_step.1} parent=0
    #allocation3 [shape = 'u8[512]{0}', space=smem, size = 0x200, scoped, tag = 'input window, operand 0, single buffered']
    #allocation4 [shape = 's32[1]{0}', space=sflag, size = 0x4, scoped, tag = 'scoped memory for decoder_step.1']
    #allocation5 [shape = 's32[1]{0}', space=sflag, size = 0x4, scoped, tag = 'scoped memory for decoder_step.1']
    #allocation6 [shape = 's32[1]{0}', space=sflag, size = 0x4, scoped, tag = 'scoped memory for decoder_step.1']
    #allocation7 [shape = 'u8[8192]{0}', space=vmem, size = 0x2000, scoped, tag = 'input window, operand 2, single buffered']
    #allocation8 [shape = 'u8[8192]{0}', space=vmem, size = 0x2000, scoped, tag = 'input window, operand 3, single buffered']
    #allocation9 [shape = 's32[1]{0}', space=sflag, size = 0x4, scoped, tag = 'scoped memory for decoder_step.1']
    #allocation10 [shape = 'u8[4096]{0}', space=vmem, size = 0x1000, scoped, tag = 'output window, operand 0, single buffered']
    #allocation11 [shape = 'u8[8192]{0}', space=vmem, size = 0x2000, scoped, tag = 'output window, operand 1, single buffered']
    #allocation12 [shape = 's32[1]{0}', space=sflag, size = 0x4, scoped, tag = 'scoped memory for decoder_step.1']
    #allocation13 [shape = 'u8[8192]{0}', space=vmem, size = 0x2000, scoped, tag = 'output window, operand 2, single buffered']
    %20 = vsyncpa [#allocation6], 0
    %21 = vsyncpa [#allocation4], 0
    %22 = vsyncpa [#allocation9], 0
    %23 = vsyncpa [#allocation5], 0
    %24 = vsyncpa [#allocation12], 0
    // Predicated region
    $region2: #{decoder_step.1} parent=1 // pred_check
      _
    $region3: #{decoder_step.1} parent=1 // pred_check_branch
      %26 = sbr.rel (0) target = $region5
    $region4: #{decoder_step.1} parent=1 // pred_region
      %s28 = ssub.s32 16, 16
      %29 = vsyncadd [#allocation6], %s28
      %s31 = sshll.u32 %s0, 4
      %s32 = int_to_ptr.vmem [resolvable:$true] %s31
      %34 = dma.vmem_to_smem %s32, 16, [#allocation3], [#allocation6]
    $region5: #{decoder_step.1} parent=1 // pred_fallthru
      _
    // Predicated region
    $region6: #{decoder_step.1} parent=1 // pred_check
      _
    $region7: #{decoder_step.1} parent=1 // pred_check_branch
      %36 = sbr.rel (0) target = $region9
    $region8: #{decoder_step.1} parent=1 // pred_region
      _
    $region9: #{decoder_step.1} parent=1 // pred_fallthru
      _
    // Predicated region
    $region10: #{decoder_step.1} parent=1 // pred_check
      _
    $region11: #{decoder_step.1} parent=1 // pred_check_branch
      %38 = sbr.rel (0) target = $region13
    $region12: #{decoder_step.1} parent=1 // pred_region
      %s40 = ssub.s32 256, 256
      %41 = vsyncadd [#allocation4], %s40
      %s42 = sshll.u32 [#allocation7], 4
      %s43 = int_to_ptr.vmem [resolvable:$true] %s42
      %48 = dma.hbm_to_vmem [thread:$0]  %s2, 256, %s43, [#allocation4], 128, 128, 8
    $region13: #{decoder_step.1} parent=1 // pred_fallthru
      _
    // Predicated region
    $region14: #{decoder_step.1} parent=1 // pred_check
      _
    $region15: #{decoder_step.1} parent=1 // pred_check_branch
      %50 = sbr.rel (0) target = $region17
    $region16: #{decoder_step.1} parent=1 // pred_region
      %s52 = ssub.s32 256, 256
      %53 = vsyncadd [#allocation9], %s52
      %s54 = sshll.u32 [#allocation8], 4
      %s55 = int_to_ptr.vmem [resolvable:$true] %s54
      %60 = dma.hbm_to_vmem [thread:$0]  %s3, 256, %s55, [#allocation9], 128, 128, 8
    $region17: #{decoder_step.1} parent=1 // pred_fallthru
      _
    // Predicated region
    $region18: #{decoder_step.1} parent=1 // pred_check
      _
    $region19: #{decoder_step.1} parent=1 // pred_check_branch
      %62 = sbr.rel (0) target = $region21
    $region20: #{decoder_step.1} parent=1 // pred_region
      _
    $region21: #{decoder_step.1} parent=1 // pred_fallthru
      _
    // Predicated region
    $region22: #{decoder_step.1} parent=1 // pred_check
      _
    $region23: #{decoder_step.1} parent=1 // pred_check_branch
      %64 = sbr.rel (0) target = $region25
    $region24: #{decoder_step.1} parent=1 // pred_region
      _
    $region25: #{decoder_step.1} parent=1 // pred_fallthru
      _
    // Predicated region
    $region26: #{decoder_step.1} parent=1 // pred_check
      _
    $region27: #{decoder_step.1} parent=1 // pred_check_branch
      %66 = sbr.rel (0) target = $region29
    $region28: #{decoder_step.1} parent=1 // pred_region
      _
    $region29: #{decoder_step.1} parent=1 // pred_fallthru
      _
    // Predicated region
    $region30: #{decoder_step.1} parent=1 // pred_check
      _
    $region31: #{decoder_step.1} parent=1 // pred_check_branch
      %68 = sbr.rel (0) target = $region33
    $region32: #{decoder_step.1} parent=1 // pred_region
      _
    $region33: #{decoder_step.1} parent=1 // pred_fallthru
      _
    // Predicated region
    $region34: #{decoder_step.1} parent=1 // pred_check
      _
    $region35: #{decoder_step.1} parent=1 // pred_check_branch
      %70 = sbr.rel (0) target = $region37
    $region36: #{decoder_step.1} parent=1 // pred_region
      _
    $region37: #{decoder_step.1} parent=1 // pred_fallthru
      _
    // Predicated region
    $region38: #{decoder_step.1} parent=1 // pred_check
      _
    $region39: #{decoder_step.1} parent=1 // pred_check_branch
      %72 = sbr.rel (0) target = $region41
    $region40: #{decoder_step.1} parent=1 // pred_region
      _
    $region41: #{decoder_step.1} parent=1 // pred_fallthru
      _
    // Predicated region
    $region42: #{decoder_step.1} parent=1 // pred_check
      _
    $region43: #{decoder_step.1} parent=1 // pred_check_branch
      %74 = sbr.rel (0) target = $region45
    $region44: #{decoder_step.1} parent=1 // pred_region
      _
    $region45: #{decoder_step.1} parent=1 // pred_fallthru
      _
    // Predicated region
    $region46: #{decoder_step.1} parent=1 // pred_check
      _
    $region47: #{decoder_step.1} parent=1 // pred_check_branch
      %76 = sbr.rel (0) target = $region49
    $region48: #{decoder_step.1} parent=1 // pred_region
      _
    $region49: #{decoder_step.1} parent=1 // pred_fallthru
      _
    // Predicated region
    $region50: #{decoder_step.1} parent=1 // pred_check
      _
    $region51: #{decoder_step.1} parent=1 // pred_check_branch
      %78 = sbr.rel (0) target = $region53
    $region52: #{decoder_step.1} parent=1 // pred_region
      %79 = dma.done [#allocation6], 16
    $region53: #{decoder_step.1} parent=1 // pred_fallthru
      _
    // Predicated region
    $region54: #{decoder_step.1} parent=1 // pred_check
      _
    $region55: #{decoder_step.1} parent=1 // pred_check_branch
      %81 = sbr.rel (0) target = $region57
    $region56: #{decoder_step.1} parent=1 // pred_region
      %82 = dma.done [#allocation4], 256
    $region57: #{decoder_step.1} parent=1 // pred_fallthru
      _
    // Predicated region
    $region58: #{decoder_step.1} parent=1 // pred_check
      _
    $region59: #{decoder_step.1} parent=1 // pred_check_branch
      %84 = sbr.rel (0) target = $region61
    $region60: #{decoder_step.1} parent=1 // pred_region
      %85 = dma.done [#allocation9], 256
    $region61: #{decoder_step.1} parent=1 // pred_fallthru
      _
    %86 = sfence
    %s88 = sld [smem:[#allocation3]]
    %s89 = scalar_lea.vmem %s1, %s88
    %v90 = vld [vmem:[%s89] sm:$0x1]
    %vm91 = vcmask 253952
    %92 = vst.msk [vmem:[#allocation2] sm:$0x1] %vm91, %v90
    %s93 = sld [smem:[#allocation3 + $0x1]]
    %s94 = scalar_lea.vmem %s1, %s93
    %v95 = vld [vmem:[%s94] sm:$0x1]
    %96 = vst.msk [vmem:[#allocation2 + $0x1] sm:$0x1] %vm91, %v95
    %s97 = sld [smem:[#allocation3 + $0x2]]
    %s98 = scalar_lea.vmem %s1, %s97
    %v99 = vld [vmem:[%s98] sm:$0x1]
    %100 = vst.msk [vmem:[#allocation2 + $0x2] sm:$0x1] %vm91, %v99
    %s101 = sld [smem:[#allocation3 + $0x3]]
    %s102 = scalar_lea.vmem %s1, %s101
    %v103 = vld [vmem:[%s102] sm:$0x1]
    %104 = vst.msk [vmem:[#allocation2 + $0x3] sm:$0x1] %vm91, %v103
    %s105 = sld [smem:[#allocation3 + $0x4]]
    %s106 = scalar_lea.vmem %s1, %s105
    %v107 = vld [vmem:[%s106] sm:$0x1]
    %108 = vst.msk [vmem:[#allocation2 + $0x4] sm:$0x1] %vm91, %v107
    %s109 = sld [smem:[#allocation3 + $0x5]]
    %s110 = scalar_lea.vmem %s1, %s109
    %v111 = vld [vmem:[%s110] sm:$0x1]
    %112 = vst.msk [vmem:[#allocation2 + $0x5] sm:$0x1] %vm91, %v111
    %s113 = sld [smem:[#allocation3 + $0x6]]
    %s114 = scalar_lea.vmem %s1, %s113
    %v115 = vld [vmem:[%s114] sm:$0x1]
    %116 = vst.msk [vmem:[#allocation2 + $0x6] sm:$0x1] %vm91, %v115
    %s117 = sld [smem:[#allocation3 + $0x7]]
    %s118 = scalar_lea.vmem %s1, %s117
    %v119 = vld [vmem:[%s118] sm:$0x1]
    %120 = vst.msk [vmem:[#allocation2 + $0x7] sm:$0x1] %vm91, %v119
    %v121 = vld [vmem:[#allocation2] sm:$0xff]
    %v122 = vld [vmem:[#allocation7] sm:$0xff]
    %v123 = vld [vmem:[#allocation8] sm:$0xff]
    %v124 = vpack.c.bf16 %v121, %v121
    %v125 = vld [vmem:[%s4] sm:$0xf]
    %v126 = vld [vmem:[%s4 + $0x4] sm:$0xf]
    %v127 = vld [vmem:[%s4 + $0x8] sm:$0xf]
    %v128 = vld [vmem:[%s4 + $0xc] sm:$0xf]
    %v129 = vpack.c.bf16 %v122, %v122
    %v130 = vld [vmem:[%s5] sm:$0xf]
    %v131 = vld [vmem:[%s5 + $0x4] sm:$0xf]
    %v132 = vld [vmem:[%s5 + $0x8] sm:$0xf]
    %v133 = vld [vmem:[%s5 + $0xc] sm:$0xf]
    %v138 = vunpack.c.l.b16 %v130
    %v139 = vunpack.c.l.b16 %v131
    %v140 = vunpack.c.l.b16 %v132
    %v141 = vunpack.c.l.b16 %v133
    %v142 = vpack.c.b16 %v139, %v138
    %v143 = vpack.c.b16 %v141, %v140
    %vm146 = vcmask 261120
    %v148 = vsel %vm146, %v129, 0
    %150 = vmatprep.subr.bf16.mxu0 0
    %151 = vmatpush1.bf16.msra.mxu0 %v142
    %152 = vmatprep.subr.bf16.mxu0 0
    %153 = vmatpush1.bf16.msra.mxu0 %v143
    %154 = vmatprep.subr.bf16.mxu0 0
    %155 = vmatpush1.bf16.msra.mxu0 0
    %156 = vmatprep.subr.bf16.mxu0 0
    %157 = vmatpush1.bf16.msra.mxu0 0
    %158 = vmatprep.subr.bf16.mxu0 0
    %159 = vmatpush1.bf16.msra.mxu0 0
    %160 = vmatprep.subr.bf16.mxu0 0
    %161 = vmatpush1.bf16.msra.mxu0 0
    %162 = vmatprep.subr.bf16.mxu0 0
    %163 = vmatpush1.bf16.msra.mxu0 0
    %164 = vmatprep.subr.bf16.mxu0 0
    %165 = vmatpush1.bf16.msra.mxu0 0
    %166 = vmatprep.subr.bf16.mxu0 0
    %167 = vmatpush1.bf16.msra.mxu0 0
    %168 = vmatprep.subr.bf16.mxu0 0
    %169 = vmatpush1.bf16.msra.mxu0 0
    %170 = vmatprep.subr.bf16.mxu0 0
    %171 = vmatpush1.bf16.msra.mxu0 0
    %172 = vmatprep.subr.bf16.mxu0 0
    %173 = vmatpush1.bf16.msra.mxu0 0
    %174 = vmatprep.subr.bf16.mxu0 0
    %175 = vmatpush1.bf16.msra.mxu0 0
    %176 = vmatprep.subr.bf16.mxu0 0
    %177 = vmatpush1.bf16.msra.mxu0 0
    %178 = vmatprep.subr.bf16.mxu0 0
    %179 = vmatpush1.bf16.msra.mxu0 0
    %180 = vmatprep.subr.bf16.mxu0 0
    %181 = vmatpush1.bf16.msra.mxu0 0
    %182 = vmatprep.mubr.bf16.mxu0 0
    %183 = vmatmul.mubr.bf16.gmra.mrb[0].mxu0 %v148
    %v184 = vpop.f32.mrb[0].mxu0
    %v185 = vadd.f32 0.0, %v184
    %v186 = vpop.f32.mrb[0].mxu0
    %v187 = vpop.f32.mrb[0].mxu0
    %v188 = vpop.f32.mrb[0].mxu0
    %189 = vdwg.mxu0
    %v194 = vunpack.c.l.b16 %v125
    %v195 = vunpack.c.l.b16 %v126
    %v196 = vunpack.c.l.b16 %v127
    %v197 = vunpack.c.l.b16 %v128
    %v198 = vpack.c.b16 %v195, %v194
    %v199 = vpack.c.b16 %v197, %v196
    %v203 = vsel %vm146, %v124, 0
    %205 = vmatprep.subr.bf16.mxu0 0
    %206 = vmatpush1.bf16.msra.mxu0 %v198
    %207 = vmatprep.subr.bf16.mxu0 0
    %208 = vmatpush1.bf16.msra.mxu0 %v199
    %209 = vmatprep.subr.bf16.mxu0 0
    %210 = vmatpush1.bf16.msra.mxu0 0
    %211 = vmatprep.subr.bf16.mxu0 0
    %212 = vmatpush1.bf16.msra.mxu0 0
    %213 = vmatprep.subr.bf16.mxu0 0
    %214 = vmatpush1.bf16.msra.mxu0 0
    %215 = vmatprep.subr.bf16.mxu0 0
    %216 = vmatpush1.bf16.msra.mxu0 0
    %217 = vmatprep.subr.bf16.mxu0 0
    %218 = vmatpush1.bf16.msra.mxu0 0
    %219 = vmatprep.subr.bf16.mxu0 0
    %220 = vmatpush1.bf16.msra.mxu0 0
    %221 = vmatprep.subr.bf16.mxu0 0
    %222 = vmatpush1.bf16.msra.mxu0 0
    %223 = vmatprep.subr.bf16.mxu0 0
    %224 = vmatpush1.bf16.msra.mxu0 0
    %225 = vmatprep.subr.bf16.mxu0 0
    %226 = vmatpush1.bf16.msra.mxu0 0
    %227 = vmatprep.subr.bf16.mxu0 0
    %228 = vmatpush1.bf16.msra.mxu0 0
    %229 = vmatprep.subr.bf16.mxu0 0
    %230 = vmatpush1.bf16.msra.mxu0 0
    %231 = vmatprep.subr.bf16.mxu0 0
    %232 = vmatpush1.bf16.msra.mxu0 0
    %233 = vmatprep.subr.bf16.mxu0 0
    %234 = vmatpush1.bf16.msra.mxu0 0
    %235 = vmatprep.subr.bf16.mxu0 0
    %236 = vmatpush1.bf16.msra.mxu0 0
    %237 = vmatprep.mubr.bf16.mxu0 0
    %238 = vmatmul.mubr.bf16.gmra.mrb[0].mxu0 %v203
    %v239 = vpop.f32.mrb[0].mxu0
    %v240 = vadd.f32 %v185, %v239
    %v241 = vpop.f32.mrb[0].mxu0
    %v242 = vpop.f32.mrb[0].mxu0
    %v243 = vpop.f32.mrb[0].mxu0
    %244 = vdwg.mxu0
    %v245 = vld [vmem:[%s6] sm:$0x1]
    %v247 = vlaneseq
    %v248 = vshrl.u32 %v247, 7
    %v249 = vsub.s32 0, %v248
    %v250 = vrot.slane %v245, %v249
    %v252 = vadd.f32 %v240, %v250
    %v253 = vxor.u32 %v252, 2147483648
    %v254 = vmul.f32 %v253, 1.442695
    %v255 = vpow.pop %v254
    %v256 = vadd.f32 %v255, 1.0
    %v257 = vrcp.pop %v256
    %v258 = vmul.f32 1.0, %v257
    %v259 = vtanh.pop %v252
    %261 = vrot.lane.b32.xlu0 %v123, 32
    %v262 = vpop.permute.xlu0 %261
    %v264 = vmul.f32 %v258, %v262
    %266 = vrot.lane.b32.xlu0 %v259, 32
    %v267 = vpop.permute.xlu0 %266
    %v269 = vmul.f32 %v258, %v267
    %271 = vrot.lane.b32.xlu0 %v269, 32
    %v272 = vpop.permute.xlu0 %271
    %v274 = vadd.f32 %v264, %v272
    %v275 = vtanh.pop %v274
    %277 = vrot.lane.b32.xlu0 %v275, 32
    %v278 = vpop.permute.xlu0 %277
    %v280 = vmul.f32 %v258, %v278
    %282 = vrot.lane.b32.xlu0 %v280, 64
    %v283 = vpop.permute.xlu0 %282
    %285 = vst.msk [vmem:[#allocation11] sm:$0xff] %vm146, %v283
    %287 = vrot.lane.b32.xlu0 %v274, 96
    %v288 = vpop.permute.xlu0 %287
    %290 = vst.msk [vmem:[#allocation13] sm:$0xff] %vm146, %v288
    %s291 = scalar_lea.vmem [#allocation7], 8
    %v292 = vld [vmem:[%s291] sm:$0xff]
    %s293 = scalar_lea.vmem [#allocation8], 8
    %v294 = vld [vmem:[%s293] sm:$0xff]
    %v295 = vpack.c.bf16 %v280, %v280
    %v296 = vld [vmem:[%s7] sm:$0xf]
    %v297 = vld [vmem:[%s7 + $0x4] sm:$0xf]
    %v298 = vld [vmem:[%s7 + $0x8] sm:$0xf]
    %v299 = vld [vmem:[%s7 + $0xc] sm:$0xf]
    %v300 = vpack.c.bf16 %v292, %v292
    %v301 = vld [vmem:[%s8] sm:$0xf]
    %v302 = vld [vmem:[%s8 + $0x4] sm:$0xf]
    %v303 = vld [vmem:[%s8 + $0x8] sm:$0xf]
    %v304 = vld [vmem:[%s8 + $0xc] sm:$0xf]
    %v309 = vunpack.c.l.b16 %v301
    %v310 = vunpack.c.l.b16 %v302
    %v311 = vunpack.c.l.b16 %v303
    %v312 = vunpack.c.l.b16 %v304
    %v313 = vpack.c.b16 %v310, %v309
    %v314 = vpack.c.b16 %v312, %v311
    %v318 = vsel %vm146, %v300, 0
    %320 = vmatprep.subr.bf16.mxu0 0
    %321 = vmatpush1.bf16.msra.mxu0 %v313
    %322 = vmatprep.subr.bf16.mxu0 0
    %323 = vmatpush1.bf16.msra.mxu0 %v314
    %324 = vmatprep.subr.bf16.mxu0 0
    %325 = vmatpush1.bf16.msra.mxu0 0
    %326 = vmatprep.subr.bf16.mxu0 0
    %327 = vmatpush1.bf16.msra.mxu0 0
    %328 = vmatprep.subr.bf16.mxu0 0
    %329 = vmatpush1.bf16.msra.mxu0 0
    %330 = vmatprep.subr.bf16.mxu0 0
    %331 = vmatpush1.bf16.msra.mxu0 0
    %332 = vmatprep.subr.bf16.mxu0 0
    %333 = vmatpush1.bf16.msra.mxu0 0
    %334 = vmatprep.subr.bf16.mxu0 0
    %335 = vmatpush1.bf16.msra.mxu0 0
    %336 = vmatprep.subr.bf16.mxu0 0
    %337 = vmatpush1.bf16.msra.mxu0 0
    %338 = vmatprep.subr.bf16.mxu0 0
    %339 = vmatpush1.bf16.msra.mxu0 0
    %340 = vmatprep.subr.bf16.mxu0 0
    %341 = vmatpush1.bf16.msra.mxu0 0
    %342 = vmatprep.subr.bf16.mxu0 0
    %343 = vmatpush1.bf16.msra.mxu0 0
    %344 = vmatprep.subr.bf16.mxu0 0
    %345 = vmatpush1.bf16.msra.mxu0 0
    %346 = vmatprep.subr.bf16.mxu0 0
    %347 = vmatpush1.bf16.msra.mxu0 0
    %348 = vmatprep.subr.bf16.mxu0 0
    %349 = vmatpush1.bf16.msra.mxu0 0
    %350 = vmatprep.subr.bf16.mxu0 0
    %351 = vmatpush1.bf16.msra.mxu0 0
    %352 = vmatprep.mubr.bf16.mxu0 0
    %353 = vmatmul.mubr.bf16.gmra.mrb[0].mxu0 %v318
    %v354 = vpop.f32.mrb[0].mxu0
    %v355 = vadd.f32 0.0, %v354
    %v356 = vpop.f32.mrb[0].mxu0
    %v357 = vpop.f32.mrb[0].mxu0
    %v358 = vpop.f32.mrb[0].mxu0
    %359 = vdwg.mxu0
    %361 = vrot.lane.b32.xlu0 %v295, 64
    %v362 = vpop.permute.xlu0 %361
    %v367 = vunpack.c.l.b16 %v296
    %v368 = vunpack.c.l.b16 %v297
    %v369 = vunpack.c.l.b16 %v298
    %v370 = vunpack.c.l.b16 %v299
    %v371 = vpack.c.b16 %v368, %v367
    %v372 = vpack.c.b16 %v370, %v369
    %v376 = vsel %vm146, %v362, 0
    %378 = vmatprep.subr.bf16.mxu0 0
    %379 = vmatpush1.bf16.msra.mxu0 %v371
    %380 = vmatprep.subr.bf16.mxu0 0
    %381 = vmatpush1.bf16.msra.mxu0 %v372
    %382 = vmatprep.subr.bf16.mxu0 0
    %383 = vmatpush1.bf16.msra.mxu0 0
    %384 = vmatprep.subr.bf16.mxu0 0
    %385 = vmatpush1.bf16.msra.mxu0 0
    %386 = vmatprep.subr.bf16.mxu0 0
    %387 = vmatpush1.bf16.msra.mxu0 0
    %388 = vmatprep.subr.bf16.mxu0 0
    %389 = vmatpush1.bf16.msra.mxu0 0
    %390 = vmatprep.subr.bf16.mxu0 0
    %391 = vmatpush1.bf16.msra.mxu0 0
    %392 = vmatprep.subr.bf16.mxu0 0
    %393 = vmatpush1.bf16.msra.mxu0 0
    %394 = vmatprep.subr.bf16.mxu0 0
    %395 = vmatpush1.bf16.msra.mxu0 0
    %396 = vmatprep.subr.bf16.mxu0 0
    %397 = vmatpush1.bf16.msra.mxu0 0
    %398 = vmatprep.subr.bf16.mxu0 0
    %399 = vmatpush1.bf16.msra.mxu0 0
    %400 = vmatprep.subr.bf16.mxu0 0
    %401 = vmatpush1.bf16.msra.mxu0 0
    %402 = vmatprep.subr.bf16.mxu0 0
    %403 = vmatpush1.bf16.msra.mxu0 0
    %404 = vmatprep.subr.bf16.mxu0 0
    %405 = vmatpush1.bf16.msra.mxu0 0
    %406 = vmatprep.subr.bf16.mxu0 0
    %407 = vmatpush1.bf16.msra.mxu0 0
    %408 = vmatprep.subr.bf16.mxu0 0
    %409 = vmatpush1.bf16.msra.mxu0 0
    %410 = vmatprep.mubr.bf16.mxu0 0
    %411 = vmatmul.mubr.bf16.gmra.mrb[0].mxu0 %v376
    %v412 = vpop.f32.mrb[0].mxu0
    %v413 = vadd.f32 %v355, %v412
    %v414 = vpop.f32.mrb[0].mxu0
    %v415 = vpop.f32.mrb[0].mxu0
    %v416 = vpop.f32.mrb[0].mxu0
    %417 = vdwg.mxu0
    %v418 = vld [vmem:[%s9] sm:$0x1]
    %v420 = vlaneseq
    %v421 = vshrl.u32 %v420, 7
    %v422 = vsub.s32 0, %v421
    %v423 = vrot.slane %v418, %v422
    %v425 = vadd.f32 %v413, %v423
    %v426 = vxor.u32 %v425, 2147483648
    %v427 = vmul.f32 %v426, 1.442695
    %v428 = vpow.pop %v427
    %v429 = vadd.f32 %v428, 1.0
    %v430 = vrcp.pop %v429
    %v431 = vmul.f32 1.0, %v430
    %v432 = vtanh.pop %v425
    %434 = vrot.lane.b32.xlu0 %v294, 32
    %v435 = vpop.permute.xlu0 %434
    %v437 = vmul.f32 %v431, %v435
    %439 = vrot.lane.b32.xlu0 %v432, 32
    %v440 = vpop.permute.xlu0 %439
    %v442 = vmul.f32 %v431, %v440
    %444 = vrot.lane.b32.xlu0 %v442, 32
    %v445 = vpop.permute.xlu0 %444
    %v447 = vadd.f32 %v437, %v445
    %v448 = vtanh.pop %v447
    %450 = vrot.lane.b32.xlu0 %v448, 32
    %v451 = vpop.permute.xlu0 %450
    %v453 = vmul.f32 %v431, %v451
    %455 = vrot.lane.b32.xlu0 %v453, 64
    %v456 = vpop.permute.xlu0 %455
    %s458 = scalar_lea.vmem [#allocation11], 8
    %459 = vst.msk [vmem:[%s458] sm:$0xff] %vm146, %v456
    %461 = vrot.lane.b32.xlu0 %v447, 96
    %v462 = vpop.permute.xlu0 %461
    %s464 = scalar_lea.vmem [#allocation13], 8
    %465 = vst.msk [vmem:[%s464] sm:$0xff] %vm146, %v462
    %v466 = vpack.c.bf16 %v453, %v453
    %v467 = vld [vmem:[%s10] sm:$0xf]
    %v468 = vld [vmem:[%s10 + $0x4] sm:$0xf]
    %v469 = vld [vmem:[%s10 + $0x8] sm:$0xf]
    %v470 = vld [vmem:[%s10 + $0xc] sm:$0xf]
    %v471 = vld [vmem:[%s11] sm:$0x1]
    %v473 = vlaneseq
    %v474 = vshrl.u32 %v473, 7
    %v475 = vsub.s32 0, %v474
    %v476 = vrot.slane %v471, %v475
    %479 = vrot.lane.b32.xlu0 %v466, 64
    %v480 = vpop.permute.xlu0 %479
    %v485 = vunpack.c.l.b16 %v467
    %v486 = vunpack.c.l.b16 %v468
    %v487 = vunpack.c.l.b16 %v469
    %v488 = vunpack.c.l.b16 %v470
    %v489 = vpack.c.b16 %v486, %v485
    %v490 = vpack.c.b16 %v488, %v487
    %v494 = vsel %vm146, %v480, 0
    %496 = vmatprep.subr.bf16.mxu0 0
    %497 = vmatpush1.bf16.msra.mxu0 %v489
    %498 = vmatprep.subr.bf16.mxu0 0
    %499 = vmatpush1.bf16.msra.mxu0 %v490
    %500 = vmatprep.subr.bf16.mxu0 0
    %501 = vmatpush1.bf16.msra.mxu0 0
    %502 = vmatprep.subr.bf16.mxu0 0
    %503 = vmatpush1.bf16.msra.mxu0 0
    %504 = vmatprep.subr.bf16.mxu0 0
    %505 = vmatpush1.bf16.msra.mxu0 0
    %506 = vmatprep.subr.bf16.mxu0 0
    %507 = vmatpush1.bf16.msra.mxu0 0
    %508 = vmatprep.subr.bf16.mxu0 0
    %509 = vmatpush1.bf16.msra.mxu0 0
    %510 = vmatprep.subr.bf16.mxu0 0
    %511 = vmatpush1.bf16.msra.mxu0 0
    %512 = vmatprep.subr.bf16.mxu0 0
    %513 = vmatpush1.bf16.msra.mxu0 0
    %514 = vmatprep.subr.bf16.mxu0 0
    %515 = vmatpush1.bf16.msra.mxu0 0
    %516 = vmatprep.subr.bf16.mxu0 0
    %517 = vmatpush1.bf16.msra.mxu0 0
    %518 = vmatprep.subr.bf16.mxu0 0
    %519 = vmatpush1.bf16.msra.mxu0 0
    %520 = vmatprep.subr.bf16.mxu0 0
    %521 = vmatpush1.bf16.msra.mxu0 0
    %522 = vmatprep.subr.bf16.mxu0 0
    %523 = vmatpush1.bf16.msra.mxu0 0
    %524 = vmatprep.subr.bf16.mxu0 0
    %525 = vmatpush1.bf16.msra.mxu0 0
    %526 = vmatprep.subr.bf16.mxu0 0
    %527 = vmatpush1.bf16.msra.mxu0 0
    %528 = vmatprep.mubr.bf16.mxu0 0
    %529 = vmatmul.mubr.bf16.gmra.mrb[0].mxu0 %v494
    %v530 = vpop.f32.mrb[0].mxu0
    %v531 = vadd.f32 %v476, %v530
    %v532 = vpop.f32.mrb[0].mxu0
    %v533 = vpop.f32.mrb[0].mxu0
    %v534 = vpop.f32.mrb[0].mxu0
    %535 = vdwg.mxu0
    %536 = vst [vmem:[#allocation10] sm:$0xff] %v531
    // Predicated region
    $region62: #{decoder_step.1} parent=1 // pred_check
      _
    $region63: #{decoder_step.1} parent=1 // pred_check_branch
      %538 = sbr.rel (0) target = $region65
    $region64: #{decoder_step.1} parent=1 // pred_region
      %s540 = ssub.s32 128, 128
      %541 = vsyncadd [#allocation5], %s540
      %s543 = sshll.u32 [#allocation10], 4
      %s544 = int_to_ptr.vmem [resolvable:$true] %s543
      %546 = dma.vmem_to_hbm [thread:$0]  %s544, 128, %s12, [#allocation5]
    $region65: #{decoder_step.1} parent=1 // pred_fallthru
      _
    // Predicated region
    $region66: #{decoder_step.1} parent=1 // pred_check
      _
    $region67: #{decoder_step.1} parent=1 // pred_check_branch
      %548 = sbr.rel (0) target = $region69
    $region68: #{decoder_step.1} parent=1 // pred_region
      %s550 = ssub.s32 256, 256
      %551 = vsyncadd [#allocation12], %s550
      %s552 = sshll.u32 [#allocation11], 4
      %s553 = int_to_ptr.vmem [resolvable:$true] %s552
      %558 = dma.vmem_to_hbm [thread:$0]  %s553, 256, %s13, [#allocation12], 128, 128, 8
    $region69: #{decoder_step.1} parent=1 // pred_fallthru
      _
    // Predicated region
    $region70: #{decoder_step.1} parent=1 // pred_check
      _
    $region71: #{decoder_step.1} parent=1 // pred_check_branch
      %560 = sbr.rel (0) target = $region73
    $region72: #{decoder_step.1} parent=1 // pred_region
      %s562 = ssub.s32 256, 256
      %563 = vsyncadd [#allocation12], %s562
      %s564 = sshll.u32 [#allocation13], 4
      %s565 = int_to_ptr.vmem [resolvable:$true] %s564
      %570 = dma.vmem_to_hbm [thread:$0]  %s565, 256, %s14, [#allocation12], 128, 128, 8
    $region73: #{decoder_step.1} parent=1 // pred_fallthru
      _
    // Predicated region
    $region74: #{decoder_step.1} parent=1 // pred_check
      _
    $region75: #{decoder_step.1} parent=1 // pred_check_branch
      %572 = sbr.rel (0) target = $region77
    $region76: #{decoder_step.1} parent=1 // pred_region
      %573 = dma.done [#allocation5], 128
    $region77: #{decoder_step.1} parent=1 // pred_fallthru
      _
    // Predicated region
    $region78: #{decoder_step.1} parent=1 // pred_check
      _
    $region79: #{decoder_step.1} parent=1 // pred_check_branch
      %575 = sbr.rel (0) target = $region81
    $region80: #{decoder_step.1} parent=1 // pred_region
      %576 = dma.done [#allocation12], 256
    $region81: #{decoder_step.1} parent=1 // pred_fallthru
      _
    // Predicated region
    $region82: #{decoder_step.1} parent=1 // pred_check
      _
    $region83: #{decoder_step.1} parent=1 // pred_check_branch
      %578 = sbr.rel (0) target = $region85
    $region84: #{decoder_step.1} parent=1 // pred_region
      %579 = dma.done [#allocation12], 256
    $region85: #{decoder_step.1} parent=1 // pred_fallthru
      _
    %580 = vsyncpa [#allocation4], 1
    %581 = vsyncpa [#allocation9], 1
    %582 = vsyncpa [#allocation5], 1
    %583 = vsyncpa [#allocation12], 1
    %584 = vsyncpa [#allocation6], 1

</llo_original>
